<compile_context>
chip_gen: v7x
topology: tpu7x:2x2x1
jax: 0.10.0
libtpu: 0.0.40
codegen_flags: <defaults>
</compile_context>

<pallas_src>
import functools

import numpy as np
import jax
import jax.numpy as jnp
from jax.experimental import pallas as pl
from jax.experimental.pallas import tpu as pltpu

OUT_PAD = 128               # lane-dense detection-head output width (real cols: 6)
HWP = 128                   # head_width padded to a full MXU / vreg lane width
_VMEM_LIMIT = 32 * 1024 * 1024   # explicit scoped-VMEM budget (safe v5e/v6e/v7x)

_BUF1_OK = None             # is pipeline_mode=pl.Buffered(1) supported?


# ---------------------------------------------------------------------------
# BlockSpec helpers
# ---------------------------------------------------------------------------
def _probe_copy_kernel(x_ref, o_ref):
    o_ref[...] = x_ref[...]


def _buffered1_supported():
    """Probe once whether single-buffered resident blocks lower on this JAX/TPU."""
    global _BUF1_OK
    if _BUF1_OK is not None:
        return _BUF1_OK
    try:
        spec = pl.BlockSpec((8, 128), lambda i: (0, 0),
                            pipeline_mode=pl.Buffered(1))
        x = jnp.zeros((8, 128), jnp.float32)
        out = pl.pallas_call(
            _probe_copy_kernel,
            out_shape=jax.ShapeDtypeStruct((8, 128), jnp.float32),
            grid=(1,),
            in_specs=[spec],
            out_specs=pl.BlockSpec((8, 128), lambda i: (0, 0)),
        )(x)
        jax.block_until_ready(out)
        _BUF1_OK = True
    except Exception:   # noqa: BLE001 - any failure -> plain (double-buffered) spec
        _BUF1_OK = False
    return _BUF1_OK


def _resident_spec(block_shape, index_map):
    """BlockSpec for a block that is identical across every grid step.

    Single-buffered so resident weights/biases cost 1x (not 2x) VMEM.
    """
    if _buffered1_supported():
        return pl.BlockSpec(block_shape, index_map, pipeline_mode=pl.Buffered(1))
    return pl.BlockSpec(block_shape, index_map)


def _pick_tile(m, max_tile, min_parts=1):
    """Largest 8-aligned power-of-2 tile <= max_tile dividing m (>= min_parts tiles)."""
    for t in (1024, 512, 256, 128, 64, 32, 16, 8):
        if t <= max_tile and t <= m and m % t == 0 and m // t >= min_parts:
            return t
    return m


# ---------------------------------------------------------------------------
# Pallas kernels
# ---------------------------------------------------------------------------
def _vision_kernel(x_ref, pw_ref, pb_ref, vw_ref, vb_ref, o_ref):
    """Fused ViT patch embedding + vis_proj: (rows, patch_dim) -> (rows, lang_dim).

    bf16 operands, f32 accumulation, bf16 store.
    """
    bf = jnp.bfloat16
    feats = jnp.dot(x_ref[...], pw_ref[...],
                    preferred_element_type=jnp.float32) + pb_ref[...]
    proj = jnp.dot(feats.astype(bf), vw_ref[...],
                   preferred_element_type=jnp.float32) + vb_ref[...]
    o_ref[...] = proj.astype(o_ref.dtype)
    # TODO(synk): at real Flamingo dims (vis_dim 1024, lang_dim 4096) add a
    # K-reduction grid axis ("arbitrary", last) + f32 VMEM accumulator instead
    # of keeping whole weights resident.


def _lang_block_kernel(emb_ref, kv_ref, w1_ref, b1_ref, w2_ref, b2_ref, o_ref,
                       *, scale):
    """One (batch, S-tile) block: visual cross-attention (residual) + 2-layer MLP.

    All intermediates stay in VMEM/vregs; only (S_tile, hidden) leaves the kernel.
    # TODO(synk): at real S/V restructure as a flash-style online-softmax kernel
    # (KV-tiled "arbitrary" axis, f32 m/l/acc scratch) + K-tiled MLP weights.
    """
    bf = jnp.bfloat16
    q = emb_ref[0]                                                   # (S_t, D) bf16
    kv = kv_ref[0]                                                   # (V, D) bf16
    s = jax.lax.dot_general(q, kv, (((1,), (1,)), ((), ())),
                            preferred_element_type=jnp.float32) * scale
    p = jax.nn.softmax(s, axis=-1)                                   # f32 softmax
    h = q.astype(jnp.float32) + jnp.dot(p.astype(bf), kv,
                                        preferred_element_type=jnp.float32)
    h1 = jnp.dot(h.astype(bf), w1_ref[...],
                 preferred_element_type=jnp.float32) + b1_ref[...]
    # NOTE: tanh-approx GELU (jax default); PyTorch nn.GELU defaults to exact erf.
    h1 = jax.nn.gelu(h1)
    h2 = jnp.dot(h1.astype(bf), w2_ref[...],
                 preferred_element_type=jnp.float32) + b2_ref[...]
    o_ref[0] = h2.astype(o_ref.dtype)


def _det_head_kernel(emb_ref, hid_ref, wse_ref, wsh_ref, sb_ref,
                     cw_ref, cb_ref, rw_ref, rb_ref,
                     pwr_ref, pwc_ref, pb_ref, o_ref,
                     *, stride, out_cols, size, anchor_tile):
    """Fused YOLOX-style head (1x1 convs) + decode for one (image, anchor-tile).

    stem -> {cls_conv, reg_conv} -> combined (reg|obj|cls) prediction matmul into
    a 128-lane-dense slab, then cxcywh decode (grid-add, exp, sigmoid) in-kernel.
    The broadcast visual-token hidden row contributes via one (1, HWP) matmul
    that is broadcast-added (never replicated over anchors in HBM).
    """
    bf = jnp.bfloat16
    x = emb_ref[0]                                                   # (A_t, lang_dim) bf16
    stem = jnp.dot(x, wse_ref[...], preferred_element_type=jnp.float32)
    stem = stem + jnp.dot(hid_ref[...], wsh_ref[...],
                          preferred_element_type=jnp.float32)        # (1, HWP) bcast
    stem = stem + sb_ref[...]
    stem = stem * jax.nn.sigmoid(stem)                               # SiLU (f32)
    cls_f = jnp.dot(stem.astype(bf), cw_ref[...],
                    preferred_element_type=jnp.float32) + cb_ref[...]
    cls_f = cls_f * jax.nn.sigmoid(cls_f)
    reg_f = jnp.dot(stem.astype(bf), rw_ref[...],
                    preferred_element_type=jnp.float32) + rb_ref[...]
    reg_f = reg_f * jax.nn.sigmoid(reg_f)

    # combined prediction: cols [0:4]=reg, [4]=obj, [5]=cls, rest zero-padded
    raw = (jnp.dot(reg_f.astype(bf), pwr_ref[...],
                   preferred_element_type=jnp.float32)
           + jnp.dot(cls_f.astype(bf), pwc_ref[...],
                     preferred_element_type=jnp.float32)
           + pb_ref[...])                                            # (A_t, OUT_PAD)

    # anchor grid computed in-kernel from iota (no (anchors, 128) mostly-zero DMA)
    col = jax.lax.broadcasted_iota(jnp.int32, raw.shape, 1)
    row = jax.lax.broadcasted_iota(jnp.int32, raw.shape, 0)
    aid = (row + pl.program_id(1) * anchor_tile).astype(jnp.float32)
    gy = jnp.floor((aid + 0.5) / float(size))
    gx = aid - gy * float(size)
    grid_xy = jnp.where(col == 0, gx, gy)

    wh = jnp.exp(jnp.where((col >= 2) & (col < 4), raw, 0.0)) * stride  # masked exp
    decoded = jnp.where(
        col < 2, (raw + grid_xy) * stride,                           # cx, cy
        jnp.where(col < 4, wh,                                       # w, h
                  jnp.where(col < out_cols, jax.nn.sigmoid(raw),     # obj, cls
                            0.0)))
    o_ref[0] = decoded


# ---------------------------------------------------------------------------
# Host-side post-processing helpers (same semantics as open_flamingo utils)
# ---------------------------------------------------------------------------
def cxcywh2xyxy(boxes):
    b = boxes.copy()
    b[:, 0] = boxes[:, 0] - boxes[:, 2] / 2.0
    b[:, 1] = boxes[:, 1] - boxes[:, 3] / 2.0
    b[:, 2] = boxes[:, 0] + boxes[:, 2] / 2.0
    b[:, 3] = boxes[:, 1] + boxes[:, 3] / 2.0
    return b


def nms(boxes, scores, nms_thr):
    # TODO(synk): NMS is data-dependent host-side post-processing; no clean
    # Pallas equivalent, implemented in numpy.
    if len(boxes) == 0:
        return np.array([], dtype=np.int64)
    x1, y1, x2, y2 = boxes[:, 0], boxes[:, 1], boxes[:, 2], boxes[:, 3]
    areas = (x2 - x1) * (y2 - y1)
    order = scores.argsort()[::-1]
    keep = []
    while order.size > 0:
        i = order[0]
        keep.append(int(i))
        xx1 = np.maximum(x1[i], x1[order[1:]])
        yy1 = np.maximum(y1[i], y1[order[1:]])
        xx2 = np.minimum(x2[i], x2[order[1:]])
        yy2 = np.minimum(y2[i], y2[order[1:]])
        w = np.maximum(0.0, xx2 - xx1)
        h = np.maximum(0.0, yy2 - yy1)
        inter = w * h
        ovr = inter / (areas[i] + areas[order[1:]] - inter + 1e-12)
        inds = np.where(ovr <= nms_thr)[0]
        order = order[inds + 1]
    return np.array(keep, dtype=np.int64)


# ---------------------------------------------------------------------------
# Flamingo model (forward-pass semantics, Pallas hot path)
# ---------------------------------------------------------------------------
class Flamingo:
    def __init__(self, *, eoc_token_id, media_token_id, image_end_token_id,
                 visual_token_id, previsual_token_id, box_token_id,
                 prebox_token_id, endofobject_token_id, vis_dim, vis_embed_size,
                 lang_dim, hidden_state_dim, image_size, patch_size,
                 vocab_size=64, in_chans=3, head_width=32):
        self.eoc_token_id = eoc_token_id
        self.media_token_id = media_token_id
        self.image_end_token_id = image_end_token_id
        self.visual_token_id = visual_token_id
        self.previsual_token_id = previsual_token_id
        self.box_token_id = box_token_id
        self.prebox_token_id = prebox_token_id
        self.endofobject_token_id = endofobject_token_id
        self.vis_dim = vis_dim
        self.num_positions = vis_embed_size
        self.lang_dim = lang_dim
        self.hidden_state_dim = hidden_state_dim
        self.image_size = image_size
        self.patch_size = patch_size
        self.head_width = head_width
        self.training = False
        self.image_embedding = None
        self._vis_condition = None

        # Deterministic synthetic parameter init.
        key = jax.random.PRNGKey(42)
        keys = jax.random.split(key, 16)
        bf = jnp.bfloat16

        def p(k, shape, scale=0.02):
            return scale * jax.random.normal(k, shape, jnp.float32)

        patch_dim = in_chans * patch_size * patch_size
        det_in = lang_dim + hidden_state_dim          # detection-head in_channels
        hw = head_width

        # YOLOX-style prediction heads (num_classes=1) combined into one
        # lane-dense (HWP, OUT_PAD) weight: cols [0:4]=reg, [4]=obj, [5]=cls.
        cls_pred_w = p(keys[7], (hw, 1))
        reg_pred_w = p(keys[9], (hw, 4))
        obj_pred_w = p(keys[10], (hw, 1))
        pred_w_reg = jnp.concatenate(
            [reg_pred_w, obj_pred_w, jnp.zeros((hw, 1), jnp.float32)], axis=1)
        pred_w_cls = jnp.concatenate(
            [jnp.zeros((hw, 5), jnp.float32), cls_pred_w], axis=1)
        pred_w_reg = jnp.pad(pred_w_reg,
                             ((0, HWP - hw), (0, OUT_PAD - 6))).astype(bf)
        pred_w_cls = jnp.pad(pred_w_cls,
                             ((0, HWP - hw), (0, OUT_PAD - 6))).astype(bf)

        # stem 1x1 conv split into [W_emb ; W_hid] so the broadcast hidden row
        # is multiplied once, not per anchor; N padded to 128 lanes.
        stem_w_full = p(keys[5], (det_in, hw))
        stem_w_emb = jnp.pad(stem_w_full[:lang_dim],
                             ((0, 0), (0, HWP - hw))).astype(bf)
        stem_w_hid = jnp.pad(stem_w_full[lang_dim:],
                             ((0, 0), (0, HWP - hw))).astype(bf)
        cls_conv_w = jnp.pad(p(keys[6], (hw, hw)),
                             ((0, HWP - hw), (0, HWP - hw))).astype(bf)
        reg_conv_w = jnp.pad(p(keys[8], (hw, hw)),
                             ((0, HWP - hw), (0, HWP - hw))).astype(bf)

        # Matmul weights stored bf16 (half the weight DMA, MXU-native); biases
        # f32 and pre-shaped (1, N) so elementwise adds stay f32 with no
        # per-call reshapes.
        self.params = {
            # vision encoder stand-in (ViT patch embedding)
            "patch_w": p(keys[0], (patch_dim, vis_dim)).astype(bf),
            "patch_b": jnp.zeros((1, vis_dim), jnp.float32),
            # vis_proj = nn.Linear(vis_dim, lang_dim)
            "vis_proj_w": p(keys[1], (vis_dim, lang_dim)).astype(bf),
            "vis_proj_b": jnp.zeros((1, lang_dim), jnp.float32),
            # language encoder stand-in
            "tok_emb": p(keys[2], (vocab_size, lang_dim)).astype(bf),
            "mlp_w1": p(keys[3], (lang_dim, lang_dim)).astype(bf),
            "mlp_b1": jnp.zeros((1, lang_dim), jnp.float32),
            "mlp_w2": p(keys[4], (lang_dim, hidden_state_dim)).astype(bf),
            "mlp_b2": jnp.zeros((1, hidden_state_dim), jnp.float32),
            # YOLOX-style detection head (1x1 convs), lane-padded to HWP
            "stem_w_emb": stem_w_emb,
            "stem_w_hid": stem_w_hid,
            "stem_b": jnp.zeros((1, HWP), jnp.float32),
            "cls_conv_w": cls_conv_w,
            "cls_conv_b": jnp.zeros((1, HWP), jnp.float32),
            "reg_conv_w": reg_conv_w,
            "reg_conv_b": jnp.zeros((1, HWP), jnp.float32),
            "pred_w_reg": pred_w_reg,
            "pred_w_cls": pred_w_cls,
            "pred_b": jnp.zeros((1, OUT_PAD), jnp.float32),
        }

    # -------------------- fused vision encoder + vis_proj --------------------
    def _vision_proj(self, patches_bf16):
        """patches: (M, patch_dim) bf16 -> (M, lang_dim) bf16. Row-tiled grid."""
        M, patch_dim = patches_bf16.shape
        vd, ld = self.vis_dim, self.lang_dim
        row_tile = _pick_tile(M, max_tile=512)     # 512 ~ 85% of HBM roofline on v6e
        prm = self.params
        return pl.pallas_call(
            _vision_kernel,
            out_shape=jax.ShapeDtypeStruct((M, ld), jnp.bfloat16),
            grid=(M // row_tile,),
            in_specs=[
                pl.BlockSpec((row_tile, patch_dim), lambda i: (i, 0)),
                _resident_spec((patch_dim, vd), lambda i: (0, 0)),
                _resident_spec((1, vd), lambda i: (0, 0)),
                _resident_spec((vd, ld), lambda i: (0, 0)),
                _resident_spec((1, ld), lambda i: (0, 0)),
            ],
            out_specs=pl.BlockSpec((row_tile, ld), lambda i: (i, 0)),
            compiler_params=pltpu.CompilerParams(
                dimension_semantics=("parallel",),
                vmem_limit_bytes=_VMEM_LIMIT),
        )(patches_bf16, prm["patch_w"], prm["patch_b"],
          prm["vis_proj_w"], prm["vis_proj_b"])

    # -------------------- _encode_vision_x --------------------
    def _encode_vision_x(self, vision_x, image_nums=None, image_start_index_list=None,
                         added_bbox_list=None, num_beams=None, input_ids=None):
        assert vision_x.ndim == 6, "vision_x should be of shape (b, T_img, F, C, H, W)"
        b, T, F = vision_x.shape[:3]
        assert F == 1, "Only single frame supported"
        vx = vision_x.reshape(b * T * F, *vision_x.shape[3:])        # (N, C, H, W)
        N, C, H, W = vx.shape
        ps = self.patch_size
        gh, gw = H // ps, W // ps
        patches = vx.reshape(N, C, gh, ps, gw, ps)
        patches = patches.transpose(0, 2, 4, 1, 3, 5).reshape(N * gh * gw, C * ps * ps)
        patches = patches.astype(jnp.bfloat16)                       # bf16 into kernel
        # mean over F commutes with the (affine) projection, so patch-embed and
        # vis_proj are fused into a single Pallas kernel.
        proj = self._vision_proj(patches)                            # (N*v, lang_dim) bf16
        proj = proj.reshape(b, T, F, gh * gw, self.lang_dim).mean(axis=2)
        # torch-style .squeeze(1): only drops T when T == 1
        if proj.shape[1] == 1:
            proj = proj[:, 0]                                        # (b, v, lang_dim)
        self.image_embedding = proj
        self._vis_condition = (proj if proj.ndim == 3
                               else proj.reshape(b, -1, self.lang_dim))
        # TODO(synk): _get_data_list_and_visual_tokens (box/prebox region pooling)
        # requires Python-loop, data-dependent region gathers; skipped
        # (added_bbox_list is None in this run).

    # -------------------- fused language encoder stand-in --------------------
    def _lang_encoder(self, input_ids):
        b, S = input_ids.shape
        D, Hd = self.lang_dim, self.hidden_state_dim
        kv = self._vis_condition                                     # (b, V, D) bf16
        assert kv is not None and kv.shape[0] == b
        V = kv.shape[1]
        emb = jnp.take(self.params["tok_emb"], input_ids, axis=0)    # (b, S, D) bf16
        s_tile = _pick_tile(S, max_tile=256, min_parts=2)            # 2nd parallel axis
        kern = functools.partial(_lang_block_kernel, scale=1.0 / float(np.sqrt(D)))
        hidden = pl.pallas_call(
            kern,
            out_shape=jax.ShapeDtypeStruct((b, S, Hd), jnp.float32),
            grid=(b, S // s_tile),
            in_specs=[
                pl.BlockSpec((1, s_tile, D), lambda i, j: (i, j, 0)),
                pl.BlockSpec((1, V, D), lambda i, j: (i, 0, 0)),
                _resident_spec((D, D), lambda i, j: (0, 0)),
                _resident_spec((1, D), lambda i, j: (0, 0)),
                _resident_spec((D, Hd), lambda i, j: (0, 0)),
                _resident_spec((1, Hd), lambda i, j: (0, 0)),
            ],
            out_specs=pl.BlockSpec((1, s_tile, Hd), lambda i, j: (i, j, 0)),
            compiler_params=pltpu.CompilerParams(
                dimension_semantics=("parallel", "parallel"),
                vmem_limit_bytes=_VMEM_LIMIT),
        )(emb, kv,
          self.params["mlp_w1"], self.params["mlp_b1"],
          self.params["mlp_w2"], self.params["mlp_b2"])
        return {"hidden_states": (hidden,)}

    # -------------------- fused YOLOX-style detection head --------------------
    def _detection_head(self, emb, hid_row):
        """emb: (num_images, anchors, lang_dim) bf16; hid_row: (1, hidden_dim) bf16."""
        num_images, anchors, ld = emb.shape
        size = int(round(anchors ** 0.5))
        hd = self.hidden_state_dim
        prm = self.params
        anchor_tile = _pick_tile(anchors, max_tile=512, min_parts=2)  # 2nd parallel axis
        kern = functools.partial(_det_head_kernel, stride=float(self.patch_size),
                                 out_cols=6, size=size, anchor_tile=anchor_tile)
        return pl.pallas_call(
            kern,
            out_shape=jax.ShapeDtypeStruct((num_images, anchors, OUT_PAD), jnp.float32),
            grid=(num_images, anchors // anchor_tile),
            in_specs=[
                pl.BlockSpec((1, anchor_tile, ld), lambda i, j: (i, j, 0)),
                _resident_spec((1, hd), lambda i, j: (0, 0)),
                _resident_spec((ld, HWP), lambda i, j: (0, 0)),
                _resident_spec((hd, HWP), lambda i, j: (0, 0)),
                _resident_spec((1, HWP), lambda i, j: (0, 0)),
                _resident_spec((HWP, HWP), lambda i, j: (0, 0)),
                _resident_spec((1, HWP), lambda i, j: (0, 0)),
                _resident_spec((HWP, HWP), lambda i, j: (0, 0)),
                _resident_spec((1, HWP), lambda i, j: (0, 0)),
                _resident_spec((HWP, OUT_PAD), lambda i, j: (0, 0)),
                _resident_spec((HWP, OUT_PAD), lambda i, j: (0, 0)),
                _resident_spec((1, OUT_PAD), lambda i, j: (0, 0)),
            ],
            out_specs=pl.BlockSpec((1, anchor_tile, OUT_PAD), lambda i, j: (i, j, 0)),
            compiler_params=pltpu.CompilerParams(
                dimension_semantics=("parallel", "parallel"),
                vmem_limit_bytes=_VMEM_LIMIT),
        )(emb, hid_row,
          prm["stem_w_emb"], prm["stem_w_hid"], prm["stem_b"],
          prm["cls_conv_w"], prm["cls_conv_b"],
          prm["reg_conv_w"], prm["reg_conv_b"],
          prm["pred_w_reg"], prm["pred_w_cls"], prm["pred_b"])

    # -------------------- get_detection_result --------------------
    def get_detection_result(self, input_ids, hidden_states, nms_thr=0.45, score_thr=0.01):
        assert input_ids.shape[0] == 1, "only batch size = 1 is supported yet"
        visual_token_hidden_state = hidden_states[..., -1, :]        # (b, hidden_dim)
        hid_row = visual_token_hidden_state[0:1].astype(jnp.bfloat16)  # (1, hidden_dim)
        emb = self.image_embedding
        if emb.ndim == 2:
            emb = emb[None]
        emb = emb.astype(jnp.bfloat16)                               # (n_img, v, lang_dim)
        num_images = emb.shape[0]
        outputs = self._detection_head(emb, hid_row)[..., :6]        # one gridded kernel
        outputs_np = np.asarray(outputs)                             # single bulk transfer
        boxes_list, scores_list = [], []
        for bi in range(num_images):
            boxes = outputs_np[bi, :, :4]
            # NOTE: like the reference, only the objectness score is used here.
            scores = outputs_np[bi, :, 4]
            mask = scores > score_thr
            boxes = cxcywh2xyxy(boxes[mask])
            scores = scores[mask]
            keep = nms(boxes, scores, nms_thr=nms_thr)
            boxes_list.append(boxes[keep])
            scores_list.append(scores[keep])
        if len(boxes_list) == 1:
            boxes_list = boxes_list[0]
            scores_list = scores_list[0]
        return boxes_list, scores_list

    # -------------------- forward --------------------
    def forward(self, vision_x, lang_x, attention_mask=None, labels=None,
                use_cached_vision_x=False, clear_conditioned_layers=True,
                past_key_values=None, use_cache=False, image_nums=None,
                image_start_index_list=None, added_bbox_list=None):
        self.valid = True
        if use_cached_vision_x:
            assert vision_x is None
            assert self._vis_condition is not None  # mirrors lang_encoder.is_conditioned()
        elif sum(image_nums) != 0:
            self._encode_vision_x(vision_x=vision_x, image_nums=image_nums,
                                  image_start_index_list=image_start_index_list,
                                  added_bbox_list=added_bbox_list, input_ids=lang_x)
        output = self._lang_encoder(lang_x)
        hidden_states = output["hidden_states"][-1]
        if self.training and added_bbox_list is not None:
            # TODO(synk): get_detection_losses / YOLOX training loss needs
            # data-dependent Python-loop batching and label assignment.
            pass
        elif labels is None:
            boxes, scores = self.get_detection_result(lang_x, hidden_states)
            output["boxes"] = boxes
            output["scores"] = scores
        if clear_conditioned_layers:
            self._vis_condition = None
        return output


# ---------------------------------------------------------------------------
if __name__ == "__main__":
    key = jax.random.PRNGKey(0)
    k_vis, k_lang = jax.random.split(key)

    b, T, F, C, H, W = 1, 1, 1, 3, 16, 16
    seq = 8
    vision_x = jax.random.normal(k_vis, (b, T, F, C, H, W), jnp.float32)
    lang_x = jax.random.randint(k_lang, (b, seq), 0, 48)
    lang_x = lang_x.at[0, 0].set(50)  # media token

    model = Flamingo(
        eoc_token_id=51, media_token_id=50, image_end_token_id=52,
        visual_token_id=53, previsual_token_id=54, box_token_id=55,
        prebox_token_id=56, endofobject_token_id=57,
        vis_dim=32, vis_embed_size=16, lang_dim=32, hidden_state_dim=32,
        image_size=16, patch_size=4,
    )

    out = model.forward(
        vision_x=vision_x, lang_x=lang_x,
        attention_mask=jnp.ones_like(lang_x), labels=None,
        image_nums=[1], image_start_index_list=[[0]], added_bbox_list=None,
    )

    jax.block_until_ready(out["hidden_states"][-1])
    _ = np.asarray(out["boxes"]), np.asarray(out["scores"])
    print("KERNEL_OK")
</pallas_src>

<mosaic_0001>
module attributes {stable_mosaic.version = 11 : i64} {
  func.func @_probe_copy_kernel(%arg0: i32, %arg1: memref<8x128xf32, #tpu.memory_space<vmem>>, %arg2: memref<8x128xf32, #tpu.memory_space<vmem>>) attributes {dimension_semantics = [#tpu.dimension_semantics<arbitrary>], iteration_bounds = array<i64: 1>, scalar_prefetch = 0 : i64, scratch_operands = 0 : i64, tpu.core_type = #tpu.core_type<tc>, window_params = [{pipeline_mode = #tpu.pipeline_mode<synchronous>, transform_indices = @transform_0, window_bounds = array<i64: 8, 128>}, {pipeline_mode = #tpu.pipeline_mode<synchronous>, transform_indices = @transform_1, window_bounds = array<i64: 8, 128>}]} {
    %c0 = arith.constant 0 : index
    %c0_0 = arith.constant 0 : index
    %0 = vector.load %arg1[%c0, %c0_0] : memref<8x128xf32, #tpu.memory_space<vmem>>, vector<8x128xf32>
    %c0_1 = arith.constant 0 : index
    %c0_2 = arith.constant 0 : index
    %1 = vector.load %arg2[%c0_1, %c0_2] : memref<8x128xf32, #tpu.memory_space<vmem>>, vector<8x128xf32>
    tpu.vector_store %arg2[%c0_1, %c0_2], %0 {strides = array<i32>} : memref<8x128xf32, #tpu.memory_space<vmem>>, vector<8x128xf32>,
    return
  }
  func.func @transform_0(%arg0: i32) -> (i32, i32) {
    %c0_i32 = arith.constant 0 : i32
    %c0_i32_0 = arith.constant 0 : i32
    %c0_i32_1 = arith.constant 0 : i32
    return %c0_i32, %c0_i32_0 : i32, i32
  }
  func.func @transform_1(%arg0: i32) -> (i32, i32) {
    %c0_i32 = arith.constant 0 : i32
    %c0_i32_0 = arith.constant 0 : i32
    %c0_i32_1 = arith.constant 0 : i32
    return %c0_i32, %c0_i32_0 : i32, i32
  }
}

module attributes {stable_mosaic.version = 11 : i64} {
  func.func @_vision_kernel(%arg0: i32, %arg1: memref<16x48xbf16, #tpu.memory_space<vmem>>, %arg2: memref<48x32xbf16, #tpu.memory_space<vmem>>, %arg3: memref<1x32xf32, #tpu.memory_space<vmem>>, %arg4: memref<32x32xbf16, #tpu.memory_space<vmem>>, %arg5: memref<1x32xf32, #tpu.memory_space<vmem>>, %arg6: memref<16x32xbf16, #tpu.memory_space<vmem>>) attributes {dimension_semantics = [#tpu.dimension_semantics<parallel>], iteration_bounds = array<i64: 1>, scalar_prefetch = 0 : i64, scratch_operands = 0 : i64, tpu.core_type = #tpu.core_type<tc>, window_params = [{transform_indices = @transform_0, window_bounds = array<i64: 16, 48>}, {pipeline_mode = #tpu.pipeline_mode<synchronous>, transform_indices = @transform_1, window_bounds = array<i64: 48, 32>}, {pipeline_mode = #tpu.pipeline_mode<synchronous>, transform_indices = @transform_2, window_bounds = array<i64: 1, 32>}, {pipeline_mode = #tpu.pipeline_mode<synchronous>, transform_indices = @transform_3, window_bounds = array<i64: 32, 32>}, {pipeline_mode = #tpu.pipeline_mode<synchronous>, transform_indices = @transform_4, window_bounds = array<i64: 1, 32>}, {transform_indices = @transform_5, window_bounds = array<i64: 16, 32>}]} {
    %c0 = arith.constant 0 : index
    %c0_0 = arith.constant 0 : index
    %0 = vector.load %arg1[%c0, %c0_0] : memref<16x48xbf16, #tpu.memory_space<vmem>>, vector<16x48xbf16>
    %c0_1 = arith.constant 0 : index
    %c0_2 = arith.constant 0 : index
    %1 = vector.load %arg2[%c0_1, %c0_2] : memref<48x32xbf16, #tpu.memory_space<vmem>>, vector<48x32xbf16>
    %cst = arith.constant dense<0.000000e+00> : vector<16x32xf32>
    %2 = tpu.matmul %0, %1, %cst {dimension_numbers = #tpu.dot_dimension_numbers<[1], [0], [0], [1], [0, 0, 1, 1], [], []>} : vector<16x48xbf16>, vector<48x32xbf16>, vector<16x32xf32> -> vector<16x32xf32>
    %c0_3 = arith.constant 0 : index
    %c0_4 = arith.constant 0 : index
    %3 = vector.load %arg3[%c0_3, %c0_4] : memref<1x32xf32, #tpu.memory_space<vmem>>, vector<1x32xf32>
    %4 = vector.broadcast %3 : vector<1x32xf32> to vector<16x32xf32>
    %5 = arith.addf %2, %4 : vector<16x32xf32>
    %6 = arith.truncf %5 : vector<16x32xf32> to vector<16x32xbf16>
    %c0_5 = arith.constant 0 : index
    %c0_6 = arith.constant 0 : index
    %7 = vector.load %arg4[%c0_5, %c0_6] : memref<32x32xbf16, #tpu.memory_space<vmem>>, vector<32x32xbf16>
    %cst_7 = arith.constant dense<0.000000e+00> : vector<16x32xf32>
    %8 = tpu.matmul %6, %7, %cst_7 {dimension_numbers = #tpu.dot_dimension_numbers<[1], [0], [0], [1], [0, 0, 1, 1], [], []>} : vector<16x32xbf16>, vector<32x32xbf16>, vector<16x32xf32> -> vector<16x32xf32>
    %c0_8 = arith.constant 0 : index
    %c0_9 = arith.constant 0 : index
    %9 = vector.load %arg5[%c0_8, %c0_9] : memref<1x32xf32, #tpu.memory_space<vmem>>, vector<1x32xf32>
    %10 = vector.broadcast %9 : vector<1x32xf32> to vector<16x32xf32>
    %11 = arith.addf %8, %10 : vector<16x32xf32>
    %12 = arith.truncf %11 : vector<16x32xf32> to vector<16x32xbf16>
    %c0_10 = arith.constant 0 : index
    %c0_11 = arith.constant 0 : index
    %13 = vector.load %arg6[%c0_10, %c0_11] : memref<16x32xbf16, #tpu.memory_space<vmem>>, vector<16x32xbf16>
    tpu.vector_store %arg6[%c0_10, %c0_11], %12 {strides = array<i32>} : memref<16x32xbf16, #tpu.memory_space<vmem>>, vector<16x32xbf16>,
    return
  }
  func.func @transform_0(%arg0: i32) -> (i32, i32) {
    %c0_i32 = arith.constant 0 : i32
    %c0_i32_0 = arith.constant 0 : i32
    return %arg0, %c0_i32 : i32, i32
  }
  func.func @transform_1(%arg0: i32) -> (i32, i32) {
    %c0_i32 = arith.constant 0 : i32
    %c0_i32_0 = arith.constant 0 : i32
    %c0_i32_1 = arith.constant 0 : i32
    return %c0_i32, %c0_i32_0 : i32, i32
  }
  func.func @transform_2(%arg0: i32) -> (i32, i32) {
    %c0_i32 = arith.constant 0 : i32
    %c0_i32_0 = arith.constant 0 : i32
    %c0_i32_1 = arith.constant 0 : i32
    return %c0_i32, %c0_i32_0 : i32, i32
  }
  func.func @transform_3(%arg0: i32) -> (i32, i32) {
    %c0_i32 = arith.constant 0 : i32
    %c0_i32_0 = arith.constant 0 : i32
    %c0_i32_1 = arith.constant 0 : i32
    return %c0_i32, %c0_i32_0 : i32, i32
  }
  func.func @transform_4(%arg0: i32) -> (i32, i32) {
    %c0_i32 = arith.constant 0 : i32
    %c0_i32_0 = arith.constant 0 : i32
    %c0_i32_1 = arith.constant 0 : i32
    return %c0_i32, %c0_i32_0 : i32, i32
  }
  func.func @transform_5(%arg0: i32) -> (i32, i32) {
    %c0_i32 = arith.constant 0 : i32
    %c0_i32_0 = arith.constant 0 : i32
    return %arg0, %c0_i32 : i32, i32
  }
}

</mosaic_0001>

<llo_original>
// kernel: tpu_custom_call.1
$region0: #{tpu_custom_call.1}
  #allocation0 [shape = 'u32[]', space=smem, size = 0x4, offset = 0x4, fixed_abs, tag = 'smem constant byte address 0x4 - core index']
  #allocation1 [shape = 'u32[144,128]{1,0:T(1,128)}', space=vmem, size = 0x12000, scoped, tag = 'internal scratch']
  %s0 = inlined_call_operand.hbm [shape: f32[8,128], index: 0, kind: input, shape index: {}]
  %s1 = inlined_call_operand.hbm [shape: f32[8,128], index: 1, kind: output, shape index: {}]
  %s2 = sld [smem:[#allocation0]]
  $region18: #{tpu_custom_call.1} parent=0
    _
  %s4 = ssub.s32 1, %s2
  %s5 = scalar_select 0, %s4, %s2
  $region1: #{tpu_custom_call.1} parent=0
    #allocation2 [shape = 'u8[4096]{0}', space=vmem, size = 0x1000, scoped, tag = 'input window, operand 0, single buffered']
    #allocation3 [shape = 's32[1]{0}', space=sflag, size = 0x4, scoped, tag = 'scoped memory for tpu_custom_call.1']
    #allocation4 [shape = 's32[1]{0}', space=sflag, size = 0x4, scoped, tag = 'scoped memory for tpu_custom_call.1']
    #allocation5 [shape = 'u8[4096]{0}', space=vmem, size = 0x1000, scoped, tag = 'output window, operand 0, single buffered']
    %6 = vsyncpa [#allocation3], 0
    %7 = vsyncpa [#allocation4], 0
    // Predicated region
    $region2: #{tpu_custom_call.1} parent=1 // pred_check
      _
    $region3: #{tpu_custom_call.1} parent=1 // pred_check_branch
      %9 = sbr.rel (0) target = $region5
    $region4: #{tpu_custom_call.1} parent=1 // pred_region
      %s11 = ssub.s32 128, 128
      %12 = vsyncadd [#allocation3], %s11
      %s14 = sshll.u32 [#allocation2], 4
      %s15 = int_to_ptr.vmem [resolvable:$true] %s14
      %17 = dma.hbm_to_vmem [thread:$0]  %s0, 128, %s15, [#allocation3]
    $region5: #{tpu_custom_call.1} parent=1 // pred_fallthru
      _
    // Predicated region
    $region6: #{tpu_custom_call.1} parent=1 // pred_check
      _
    $region7: #{tpu_custom_call.1} parent=1 // pred_check_branch
      %19 = sbr.rel (0) target = $region9
    $region8: #{tpu_custom_call.1} parent=1 // pred_region
      %20 = dma.done [#allocation3], 128
    $region9: #{tpu_custom_call.1} parent=1 // pred_fallthru
      _
    %v21 = vld [vmem:[#allocation2] sm:$0xff]
    %22 = vst [vmem:[#allocation5] sm:$0xff] %v21
    // Predicated region
    $region10: #{tpu_custom_call.1} parent=1 // pred_check
      _
    $region11: #{tpu_custom_call.1} parent=1 // pred_check_branch
      %24 = sbr.rel (0) target = $region13
    $region12: #{tpu_custom_call.1} parent=1 // pred_region
      %s26 = ssub.s32 128, 128
      %27 = vsyncadd [#allocation4], %s26
      %s29 = sshll.u32 [#allocation5], 4
      %s30 = int_to_ptr.vmem [resolvable:$true] %s29
      %32 = dma.vmem_to_hbm [thread:$0]  %s30, 128, %s1, [#allocation4]
    $region13: #{tpu_custom_call.1} parent=1 // pred_fallthru
      _
    // Predicated region
    $region14: #{tpu_custom_call.1} parent=1 // pred_check
      _
    $region15: #{tpu_custom_call.1} parent=1 // pred_check_branch
      %34 = sbr.rel (0) target = $region17
    $region16: #{tpu_custom_call.1} parent=1 // pred_region
      %35 = dma.done [#allocation4], 128
    $region17: #{tpu_custom_call.1} parent=1 // pred_fallthru
      _
    %36 = vsyncpa [#allocation3], 1
    %37 = vsyncpa [#allocation4], 1

// kernel: tpu_custom_call.1
$region0: #{tpu_custom_call.1}
  #allocation0 [shape = 'u32[]', space=smem, size = 0x4, offset = 0x4, fixed_abs, tag = 'smem constant byte address 0x4 - core index']
  #allocation1 [shape = 'u32[144,128]{1,0:T(1,128)}', space=vmem, size = 0x12000, scoped, tag = 'internal scratch']
  %s0 = inlined_call_operand.vmem [shape: bf16[16,48], index: 0, kind: input, shape index: {}]
  %s1 = inlined_call_operand.vmem [shape: bf16[48,32], index: 1, kind: input, shape index: {}]
  %s2 = inlined_call_operand.vmem [shape: f32[1,32], index: 2, kind: input, shape index: {}]
  %s3 = inlined_call_operand.vmem [shape: bf16[32,32], index: 3, kind: input, shape index: {}]
  %s4 = inlined_call_operand.vmem [shape: f32[1,32], index: 4, kind: input, shape index: {}]
  %s5 = inlined_call_operand.hbm [shape: bf16[16,32], index: 5, kind: output, shape index: {}]
  %s6 = sld [smem:[#allocation0]]
  $region30: #{tpu_custom_call.1} parent=0
    _
  %s8 = ssub.s32 1, %s6
  %s9 = scalar_select 0, %s8, %s6
  $region1: #{tpu_custom_call.1} parent=0
    #allocation2 [shape = 'u8[4096]{0}', space=vmem, size = 0x1000, scoped, tag = 'output window, operand 0, single buffered']
    #allocation3 [shape = 's32[1]{0}', space=sflag, size = 0x4, scoped, tag = 'scoped memory for tpu_custom_call.1']
    %10 = vsyncpa [#allocation3], 0
    // Predicated region
    $region2: #{tpu_custom_call.1} parent=1 // pred_check
      _
    $region3: #{tpu_custom_call.1} parent=1 // pred_check_branch
      %12 = sbr.rel (0) target = $region5
    $region4: #{tpu_custom_call.1} parent=1 // pred_region
      _
    $region5: #{tpu_custom_call.1} parent=1 // pred_fallthru
      _
    // Predicated region
    $region6: #{tpu_custom_call.1} parent=1 // pred_check
      _
    $region7: #{tpu_custom_call.1} parent=1 // pred_check_branch
      %14 = sbr.rel (0) target = $region9
    $region8: #{tpu_custom_call.1} parent=1 // pred_region
      _
    $region9: #{tpu_custom_call.1} parent=1 // pred_fallthru
      _
    // Predicated region
    $region10: #{tpu_custom_call.1} parent=1 // pred_check
      _
    $region11: #{tpu_custom_call.1} parent=1 // pred_check_branch
      %16 = sbr.rel (0) target = $region13
    $region12: #{tpu_custom_call.1} parent=1 // pred_region
      _
    $region13: #{tpu_custom_call.1} parent=1 // pred_fallthru
      _
    // Predicated region
    $region14: #{tpu_custom_call.1} parent=1 // pred_check
      _
    $region15: #{tpu_custom_call.1} parent=1 // pred_check_branch
      %18 = sbr.rel (0) target = $region17
    $region16: #{tpu_custom_call.1} parent=1 // pred_region
      _
    $region17: #{tpu_custom_call.1} parent=1 // pred_fallthru
      _
    // Predicated region
    $region18: #{tpu_custom_call.1} parent=1 // pred_check
      _
    $region19: #{tpu_custom_call.1} parent=1 // pred_check_branch
      %20 = sbr.rel (0) target = $region21
    $region20: #{tpu_custom_call.1} parent=1 // pred_region
      _
    $region21: #{tpu_custom_call.1} parent=1 // pred_fallthru
      _
    %v22 = vld [vmem:[%s0] sm:$0xf]
    %v23 = vld [vmem:[%s0 + $0x4] sm:$0xf]
    %v24 = vld [vmem:[%s1] sm:$0xf]
    %v25 = vld [vmem:[%s1 + $0x4] sm:$0xf]
    %v26 = vld [vmem:[%s1 + $0x8] sm:$0xf]
    %v27 = vld [vmem:[%s1 + $0xc] sm:$0xf]
    %v28 = vld [vmem:[%s1 + $0x10] sm:$0xf]
    %v29 = vld [vmem:[%s1 + $0x14] sm:$0xf]
    %v30 = vld [vmem:[%s2] sm:$0x1]
    %v32 = vlaneseq
    %v33 = vshrl.u32 %v32, 7
    %v34 = vsub.s32 0, %v33
    %v35 = vrot.slane %v30, %v34
    %v39 = vunpack.c.l.b16 %v22
    %v40 = vunpack.c.l.b16 %v23
    %v41 = vpack.c.b16 %v40, %v39
    %v48 = vunpack.c.l.b16 %v24
    %v49 = vunpack.c.l.b16 %v25
    %v50 = vunpack.c.l.b16 %v26
    %v51 = vunpack.c.l.b16 %v27
    %v52 = vunpack.c.l.b16 %v28
    %v53 = vunpack.c.l.b16 %v29
    %v54 = vpack.c.b16 %v49, %v48
    %v55 = vpack.c.b16 %v51, %v50
    %v56 = vpack.c.b16 %v53, %v52
    %vm60 = vcmask 392192
    %v62 = vsel %vm60, %v41, 0
    %64 = vmatprep.subr.bf16.mxu0 0
    %65 = vmatpush1.bf16.msra.mxu0 %v54
    %66 = vmatprep.subr.bf16.mxu0 0
    %67 = vmatpush1.bf16.msra.mxu0 %v55
    %68 = vmatprep.subr.bf16.mxu0 0
    %69 = vmatpush1.bf16.msra.mxu0 %v56
    %70 = vmatprep.subr.bf16.mxu0 0
    %71 = vmatpush1.bf16.msra.mxu0 0
    %72 = vmatprep.subr.bf16.mxu0 0
    %73 = vmatpush1.bf16.msra.mxu0 0
    %74 = vmatprep.subr.bf16.mxu0 0
    %75 = vmatpush1.bf16.msra.mxu0 0
    %76 = vmatprep.subr.bf16.mxu0 0
    %77 = vmatpush1.bf16.msra.mxu0 0
    %78 = vmatprep.subr.bf16.mxu0 0
    %79 = vmatpush1.bf16.msra.mxu0 0
    %80 = vmatprep.subr.bf16.mxu0 0
    %81 = vmatpush1.bf16.msra.mxu0 0
    %82 = vmatprep.subr.bf16.mxu0 0
    %83 = vmatpush1.bf16.msra.mxu0 0
    %84 = vmatprep.subr.bf16.mxu0 0
    %85 = vmatpush1.bf16.msra.mxu0 0
    %86 = vmatprep.subr.bf16.mxu0 0
    %87 = vmatpush1.bf16.msra.mxu0 0
    %88 = vmatprep.subr.bf16.mxu0 0
    %89 = vmatpush1.bf16.msra.mxu0 0
    %90 = vmatprep.subr.bf16.mxu0 0
    %91 = vmatpush1.bf16.msra.mxu0 0
    %92 = vmatprep.subr.bf16.mxu0 0
    %93 = vmatpush1.bf16.msra.mxu0 0
    %94 = vmatprep.subr.bf16.mxu0 0
    %95 = vmatpush1.bf16.msra.mxu0 0
    %96 = vmatprep.mubr.bf16.mxu0 0
    %97 = vmatmul.mubr.bf16.gmra.mrb[0].mxu0 %v62
    %v98 = vpop.f32.mrb[0].mxu0
    %v99 = vadd.f32 %v35, %v98
    %v100 = vpop.f32.mrb[0].mxu0
    %v101 = vpop.f32.mrb[0].mxu0
    %v102 = vadd.f32 %v35, %v101
    %v103 = vpop.f32.mrb[0].mxu0
    %104 = vdwg.mxu0
    %v105 = vpack.c.bf16 %v102, %v99
    %v106 = vld [vmem:[%s3] sm:$0xf]
    %v107 = vld [vmem:[%s3 + $0x4] sm:$0xf]
    %v108 = vld [vmem:[%s3 + $0x8] sm:$0xf]
    %v109 = vld [vmem:[%s3 + $0xc] sm:$0xf]
    %v110 = vld [vmem:[%s4] sm:$0x1]
    %v112 = vlaneseq
    %v113 = vshrl.u32 %v112, 7
    %v114 = vsub.s32 0, %v113
    %v115 = vrot.slane %v110, %v114
    %v121 = vunpack.c.l.b16 %v106
    %v122 = vunpack.c.l.b16 %v107
    %v123 = vunpack.c.l.b16 %v108
    %v124 = vunpack.c.l.b16 %v109
    %v125 = vpack.c.b16 %v122, %v121
    %v126 = vpack.c.b16 %v124, %v123
    %vm129 = vcmask 261120
    %v131 = vsel %vm129, %v105, 0
    %133 = vmatprep.subr.bf16.mxu0 0
    %134 = vmatpush1.bf16.msra.mxu0 %v125
    %135 = vmatprep.subr.bf16.mxu0 0
    %136 = vmatpush1.bf16.msra.mxu0 %v126
    %137 = vmatprep.subr.bf16.mxu0 0
    %138 = vmatpush1.bf16.msra.mxu0 0
    %139 = vmatprep.subr.bf16.mxu0 0
    %140 = vmatpush1.bf16.msra.mxu0 0
    %141 = vmatprep.subr.bf16.mxu0 0
    %142 = vmatpush1.bf16.msra.mxu0 0
    %143 = vmatprep.subr.bf16.mxu0 0
    %144 = vmatpush1.bf16.msra.mxu0 0
    %145 = vmatprep.subr.bf16.mxu0 0
    %146 = vmatpush1.bf16.msra.mxu0 0
    %147 = vmatprep.subr.bf16.mxu0 0
    %148 = vmatpush1.bf16.msra.mxu0 0
    %149 = vmatprep.subr.bf16.mxu0 0
    %150 = vmatpush1.bf16.msra.mxu0 0
    %151 = vmatprep.subr.bf16.mxu0 0
    %152 = vmatpush1.bf16.msra.mxu0 0
    %153 = vmatprep.subr.bf16.mxu0 0
    %154 = vmatpush1.bf16.msra.mxu0 0
    %155 = vmatprep.subr.bf16.mxu0 0
    %156 = vmatpush1.bf16.msra.mxu0 0
    %157 = vmatprep.subr.bf16.mxu0 0
    %158 = vmatpush1.bf16.msra.mxu0 0
    %159 = vmatprep.subr.bf16.mxu0 0
    %160 = vmatpush1.bf16.msra.mxu0 0
    %161 = vmatprep.subr.bf16.mxu0 0
    %162 = vmatpush1.bf16.msra.mxu0 0
    %163 = vmatprep.subr.bf16.mxu0 0
    %164 = vmatpush1.bf16.msra.mxu0 0
    %165 = vmatprep.mubr.bf16.mxu0 0
    %166 = vmatmul.mubr.bf16.gmra.mrb[0].mxu0 %v131
    %v167 = vpop.f32.mrb[0].mxu0
    %v168 = vadd.f32 %v115, %v167
    %v169 = vpop.f32.mrb[0].mxu0
    %v170 = vpop.f32.mrb[0].mxu0
    %v171 = vadd.f32 %v115, %v170
    %v172 = vpop.f32.mrb[0].mxu0
    %173 = vdwg.mxu0
    %v174 = vpack.c.bf16 %v171, %v168
    %v176 = vunpack.c.l.b16 %v174
    %v177 = vunpack.c.h.b16 %v174
    %v178 = vpack.c.b16 %v176, %v176
    %v179 = vpack.c.b16 %v177, %v177
    %vm182 = vcmask 257024
    %183 = vst.msk [vmem:[#allocation2] sm:$0xf] %vm182, %v178
    %184 = vst.msk [vmem:[#allocation2 + $0x4] sm:$0xf] %vm182, %v179
    // Predicated region
    $region22: #{tpu_custom_call.1} parent=1 // pred_check
      _
    $region23: #{tpu_custom_call.1} parent=1 // pred_check_branch
      %186 = sbr.rel (0) target = $region25
    $region24: #{tpu_custom_call.1} parent=1 // pred_region
      %s188 = ssub.s32 128, 128
      %189 = vsyncadd [#allocation3], %s188
      %s190 = sshll.u32 [#allocation2], 4
      %s191 = int_to_ptr.vmem [resolvable:$true] %s190
      %196 = dma.vmem_to_hbm [thread:$0]  %s191, 128, %s5, [#allocation3], 64, 64, 4
    $region25: #{tpu_custom_call.1} parent=1 // pred_fallthru
      _
    // Predicated region
    $region26: #{tpu_custom_call.1} parent=1 // pred_check
      _
    $region27: #{tpu_custom_call.1} parent=1 // pred_check_branch
      %198 = sbr.rel (0) target = $region29
    $region28: #{tpu_custom_call.1} parent=1 // pred_region
      %199 = dma.done [#allocation3], 128
    $region29: #{tpu_custom_call.1} parent=1 // pred_fallthru
      _
    %200 = vsyncpa [#allocation3], 1

</llo_original>
